<compile_context>
chip_gen: v7x
topology: tpu7x:2x2x1
jax: 0.10.0
libtpu: 0.0.40
codegen_flags: <defaults>
</compile_context>

<pallas_src>
import math

import numpy as np
import jax
import jax.numpy as jnp
from jax.experimental import pallas as pl
from jax.experimental.pallas import tpu as pltpu


LANE = 128
DEFAULT_TK = 8192   # V (reduction) tile; >=1 MiB bf16 tiles reach HBM roofline
DEFAULT_TB = 1024   # batch tile; keeps double-buffered working set v7x-safe


def _round_up(x: int, m: int) -> int:
    return (x + m - 1) // m * m


# --------------------------------------------------------------------------
# Kernels
# --------------------------------------------------------------------------
def sentiment_kernel(x_ref, w_ref, b_ref, o_ref, acc_ref):
    """Tiled path. grid=(batch_tiles, k_tiles); x:(tb,tk), w:(tk,O_pad),
    b:(1,O_pad) f32, o:(tb,O_pad) f32, acc:(tb,O_pad) f32 scratch."""
    k = pl.program_id(1)

    @pl.when(k == 0)
    def _init():
        # Fold the bias into the accumulator init; padded bias entries are
        # -1e30 so the padded softmax columns vanish in the epilogue.
        acc_ref[...] = jnp.broadcast_to(b_ref[...], acc_ref.shape)

    # x_tile @ W^T_tile — W was transposed/padded once host-side, so this is a
    # plain dim-0 contraction (no in-kernel W relayout). x is cast per-tile
    # (handles f32 inputs without an HBM-side cast copy). f32 MXU accumulation.
    acc_ref[...] += jnp.dot(x_ref[...].astype(w_ref.dtype), w_ref[...],
                            preferred_element_type=jnp.float32)

    @pl.when(k == pl.num_programs(1) - 1)
    def _finalize():
        logits = acc_ref[...]
        m = jnp.max(logits, axis=-1, keepdims=True)
        e = jnp.exp(logits - m)
        inv = pl.reciprocal(jnp.sum(e, axis=-1, keepdims=True), approx=True)
        o_ref[...] = (e * inv).astype(o_ref.dtype)      # lane-dense (tb, O_pad)


def sentiment_small_kernel(x_ref, w_ref, b_ref, o_ref):
    """Tiny-problem path: whole problem in one block, no grid/scratch."""
    logits = jnp.dot(x_ref[...].astype(w_ref.dtype), w_ref[...],
                     preferred_element_type=jnp.float32) + b_ref[...]
    m = jnp.max(logits, axis=-1, keepdims=True)
    e = jnp.exp(logits - m)
    inv = pl.reciprocal(jnp.sum(e, axis=-1, keepdims=True), approx=True)
    o_ref[...] = (e * inv).astype(o_ref.dtype)


# --------------------------------------------------------------------------
# One-time parameter prep (hoisted out of the per-call path)
# --------------------------------------------------------------------------
def prepare_params(weight, bias, *, param_dtype=jnp.bfloat16, tk=DEFAULT_TK):
    """weight: (O, V) PyTorch layout, bias: (O,).
    Returns (w_t, bias_pad): w_t (V_pad, O_pad) param_dtype, bias_pad (1, O_pad)
    f32 with padded entries = -1e30 (so softmax over padded columns is 0)."""
    O, V = weight.shape
    O_pad = _round_up(max(O, 1), LANE)               # lane-dense output head
    tk_eff = min(tk, _round_up(max(V, 1), LANE))
    V_pad = _round_up(max(V, 1), tk_eff)             # every k-grid block is full
    w_t = jnp.zeros((V_pad, O_pad), param_dtype).at[:V, :O].set(
        weight.T.astype(param_dtype))
    bias_pad = jnp.full((1, O_pad), -1e30, jnp.float32).at[0, :O].set(
        bias.astype(jnp.float32))
    return w_t, bias_pad


def make_bow_batch(sentences, vocab, v_pad, dtype=jnp.bfloat16):
    """Host-side bag-of-words (mirrors SentimentModel.make_bow_vec), built
    directly at the lane-padded width & kernel dtype so the per-call path does
    no pad/cast round trip through HBM. bf16 counts are exact for counts<256."""
    out = np.zeros((len(sentences), v_pad), dtype=np.float32)
    for i, s in enumerate(sentences):
        for word in s.lower().split():
            j = vocab.get(word)
            if j is not None:
                out[i, j] += 1.0
    return jnp.asarray(out, dtype=dtype)


# --------------------------------------------------------------------------
# Forward wrapper
# --------------------------------------------------------------------------
def sentiment_forward(bow, w_t, bias_pad, *, out_size=None,
                      tb=DEFAULT_TB, tk=DEFAULT_TK):
    """bow: (B, V) or (B, V_pad) f32/bf16; w_t/bias_pad from prepare_params.
    Returns f32 softmax probabilities of shape (B, out_size)."""
    B, Vx = bow.shape
    V_pad, O_pad = w_t.shape
    if out_size is None:
        out_size = O_pad

    # Pad V only if the caller didn't already (make_bow_batch produces V_pad).
    if Vx != V_pad:
        bow = jnp.pad(bow, ((0, 0), (0, V_pad - Vx)))

    tk = min(tk, V_pad)
    if V_pad % tk:
        raise ValueError("tk must divide the padded vocab; use the same tk in "
                         "prepare_params and sentiment_forward")

    B_pad0 = _round_up(max(B, 1), 8)
    x_bytes = jnp.dtype(bow.dtype).itemsize
    w_bytes = jnp.dtype(w_t.dtype).itemsize

    # ---- tiny-problem fast path: one block, no grid / scratch / pl.when ----
    small_bytes = (B_pad0 * V_pad * x_bytes + V_pad * O_pad * w_bytes
                   + B_pad0 * O_pad * 4)
    if V_pad <= tk and B_pad0 <= tb and small_bytes <= (8 << 20):
        if B != B_pad0:
            bow = jnp.pad(bow, ((0, B_pad0 - B), (0, 0)))
        probs = pl.pallas_call(
            sentiment_small_kernel,
            out_shape=jax.ShapeDtypeStruct((B_pad0, O_pad), jnp.float32),
        )(bow, w_t, bias_pad)
        return probs[:B, :out_size]

    # ---- general tiled path -------------------------------------------------
    tb = max(8, _round_up(min(tb, B_pad0), 8))
    if B_pad0 >= 16:
        # Keep >=2 batch tiles so the "parallel" axis spans both v7x TensorCores.
        tb = min(tb, max(8, _round_up(pl.cdiv(B_pad0, 2), 8)))
    B_pad = _round_up(B_pad0, tb)
    if B != B_pad:
        bow = jnp.pad(bow, ((0, B_pad - B), (0, 0)))

    grid = (B_pad // tb, V_pad // tk)                 # reduction (V) axis last

    # Double-buffered working set; size vmem_limit from it (no 32 MiB cap).
    working = (2 * tb * tk * x_bytes                  # x tiles
               + 2 * tk * O_pad * w_bytes             # W tiles
               + 2 * O_pad * 4                        # bias
               + 2 * tb * O_pad * 4                   # out tiles
               + tb * O_pad * 4)                      # f32 accumulator scratch
    vmem_limit = int(min(max(working + working // 4, 16 << 20), 96 << 20))

    probs = pl.pallas_call(
        sentiment_kernel,
        out_shape=jax.ShapeDtypeStruct((B_pad, O_pad), jnp.float32),
        grid_spec=pltpu.PrefetchScalarGridSpec(
            num_scalar_prefetch=0,
            grid=grid,
            in_specs=[
                pl.BlockSpec((tb, tk), lambda b, k: (b, k)),      # x
                pl.BlockSpec((tk, O_pad), lambda b, k: (k, 0)),   # W^T (V, O)
                pl.BlockSpec((1, O_pad), lambda b, k: (0, 0)),    # bias
            ],
            out_specs=pl.BlockSpec((tb, O_pad), lambda b, k: (b, 0)),
            scratch_shapes=[pltpu.VMEM((tb, O_pad), jnp.float32)],
        ),
        compiler_params=pltpu.CompilerParams(
            dimension_semantics=("parallel", "arbitrary"),
            vmem_limit_bytes=vmem_limit,
        ),
    )(bow, w_t, bias_pad)
    return probs[:B, :out_size]


# --------------------------------------------------------------------------
# Demo / self-test
# --------------------------------------------------------------------------
if __name__ == "__main__":
    # ---- Demo 1: SentimentModel semantics (V=32 vocab, output_size=8) ------
    V, O = 32, 8
    vocab = {f"word{i}": i for i in range(V)}

    key = jax.random.PRNGKey(0)
    kw, kb, krest = jax.random.split(key, 3)
    bound = 1.0 / math.sqrt(V)   # nn.Linear default init range
    weight = jax.random.uniform(kw, (O, V), jnp.float32, -bound, bound)
    bias = jax.random.uniform(kb, (O,), jnp.float32, -bound, bound)

    w_t, b_pad = prepare_params(weight, bias)          # once per model (static)
    V_pad = w_t.shape[0]

    sentences = [
        "Word0 word3 word3 WORD7 unknown word15 word31",
        "word1 word1 word2 nothing here word30",
        "WORD5 word5 word5 word9 word9 word21",
    ]
    bow = make_bow_batch(sentences, vocab, V_pad)      # (B, V_pad) bf16, host-built
    probs = jax.block_until_ready(sentiment_forward(bow, w_t, b_pad, out_size=O))

    # SentimentModel.forward(sentence) == softmax(linear(bow))[0][0].item()
    result = float(probs[0, 0])

    xb = bow[:, :V].astype(jnp.float32)
    wb = weight.astype(jnp.bfloat16).astype(jnp.float32)
    ref = jax.nn.softmax(xb @ wb.T + bias, axis=-1)
    assert probs.shape == (len(sentences), O)
    assert jnp.allclose(probs, ref, atol=5e-3, rtol=5e-3), (probs, ref)
    assert bool(jnp.isfinite(probs).all())
    assert 0.0 <= result <= 1.0

    # ---- Demo 2: exercise the tiled (grid) path at small shapes -------------
    V2, O2, B2 = 512, 8, 16
    kw2, kb2, kx2 = jax.random.split(krest, 3)
    w2 = jax.random.uniform(kw2, (O2, V2), jnp.float32, -0.1, 0.1)
    bi2 = jax.random.uniform(kb2, (O2,), jnp.float32, -0.1, 0.1)
    x2 = jax.random.uniform(kx2, (B2, V2), jnp.float32, 0.0, 2.0)   # f32, cast per-tile

    w_t2, b_pad2 = prepare_params(w2, bi2, tk=256)
    probs2 = jax.block_until_ready(
        sentiment_forward(x2, w_t2, b_pad2, out_size=O2, tb=8, tk=256))

    x2b = x2.astype(jnp.bfloat16).astype(jnp.float32)
    w2b = w2.astype(jnp.bfloat16).astype(jnp.float32)
    ref2 = jax.nn.softmax(x2b @ w2b.T + bi2, axis=-1)
    assert probs2.shape == (B2, O2)
    assert jnp.allclose(probs2, ref2, atol=1e-2, rtol=1e-2), (probs2, ref2)

    print("KERNEL_OK")
</pallas_src>

<mosaic_0001>
module attributes {stable_mosaic.version = 11 : i64} {
  func.func @sentiment_small_kernel(%arg0: memref<8x128xbf16, #tpu.memory_space<vmem>>, %arg1: memref<128x128xbf16, #tpu.memory_space<vmem>>, %arg2: memref<1x128xf32, #tpu.memory_space<vmem>>, %arg3: memref<8x128xf32, #tpu.memory_space<vmem>>) attributes {dimension_semantics = [], scalar_prefetch = 0 : i64, scratch_operands = 0 : i64, tpu.core_type = #tpu.core_type<tc>} {
    %c0 = arith.constant 0 : index
    %c0_0 = arith.constant 0 : index
    %0 = vector.load %arg0[%c0, %c0_0] : memref<8x128xbf16, #tpu.memory_space<vmem>>, vector<8x128xbf16>
    %c0_1 = arith.constant 0 : index
    %c0_2 = arith.constant 0 : index
    %1 = vector.load %arg1[%c0_1, %c0_2] : memref<128x128xbf16, #tpu.memory_space<vmem>>, vector<128x128xbf16>
    %cst = arith.constant dense<0.000000e+00> : vector<8x128xf32>
    %2 = tpu.matmul %0, %1, %cst {dimension_numbers = #tpu.dot_dimension_numbers<[1], [0], [0], [1], [0, 0, 1, 1], [], []>} : vector<8x128xbf16>, vector<128x128xbf16>, vector<8x128xf32> -> vector<8x128xf32>
    %c0_3 = arith.constant 0 : index
    %c0_4 = arith.constant 0 : index
    %3 = vector.load %arg2[%c0_3, %c0_4] : memref<1x128xf32, #tpu.memory_space<vmem>>, vector<1x128xf32>
    %4 = vector.broadcast %3 : vector<1x128xf32> to vector<8x128xf32>
    %5 = arith.addf %2, %4 : vector<8x128xf32>
    %cst_5 = arith.constant dense<0xFF800000> : vector<8xf32>
    %6 = vector.multi_reduction <maximumf>, %5, %cst_5 [1] : vector<8x128xf32> to vector<8xf32>
    %7 = vector.shape_cast %6 : vector<8xf32> to vector<8x1xf32>
    %8 = vector.broadcast %7 : vector<8x1xf32> to vector<8x128xf32>
    %9 = arith.subf %5, %8 : vector<8x128xf32>
    %10 = math.exp %9 : vector<8x128xf32>
    %cst_6 = arith.constant dense<0.000000e+00> : vector<8xf32>
    %11 = vector.multi_reduction <add>, %10, %cst_6 [1] : vector<8x128xf32> to vector<8xf32>
    %12 = vector.shape_cast %11 : vector<8xf32> to vector<8x1xf32>
    %13 = tpu.reciprocal %12 {approx = true} : vector<8x1xf32> -> vector<8x1xf32>
    %14 = vector.broadcast %13 : vector<8x1xf32> to vector<8x128xf32>
    %15 = arith.mulf %10, %14 : vector<8x128xf32>
    %c0_7 = arith.constant 0 : index
    %c0_8 = arith.constant 0 : index
    %16 = vector.load %arg3[%c0_7, %c0_8] : memref<8x128xf32, #tpu.memory_space<vmem>>, vector<8x128xf32>
    tpu.vector_store %arg3[%c0_7, %c0_8], %15 {strides = array<i32>} : memref<8x128xf32, #tpu.memory_space<vmem>>, vector<8x128xf32>,
    return
  }
}

</mosaic_0001>

<llo_original>
// kernel: tpu_custom_call.1
$region0: #{tpu_custom_call.1}
  #allocation0 [shape = 'u32[]', space=smem, size = 0x4, offset = 0x4, fixed_abs, tag = 'smem constant byte address 0x4 - core index']
  #allocation1 [shape = 'u32[144,128]{1,0:T(1,128)}', space=vmem, size = 0x12000, scoped, tag = 'internal scratch']
  %s0 = inlined_call_operand.hbm [shape: bf16[8,128], index: 0, kind: input, shape index: {}]
  %s1 = inlined_call_operand.hbm [shape: bf16[128,128], index: 1, kind: input, shape index: {}]
  %s2 = inlined_call_operand.vmem [shape: f32[1,128], index: 2, kind: input, shape index: {}]
  %s3 = inlined_call_operand.hbm [shape: f32[8,128], index: 3, kind: output, shape index: {}]
  %s4 = sld [smem:[#allocation0]]
  $region30: #{tpu_custom_call.1} parent=0
    _
  %s6 = ssub.s32 1, %s4
  %s7 = scalar_select 0, %s6, %s4
  $region1: #{tpu_custom_call.1} parent=0
    #allocation2 [shape = 'u8[2048]{0}', space=vmem, size = 0x800, scoped, tag = 'input window, operand 0, single buffered']
    #allocation3 [shape = 's32[1]{0}', space=sflag, size = 0x4, scoped, tag = 'scoped memory for tpu_custom_call.1']
    #allocation4 [shape = 's32[1]{0}', space=sflag, size = 0x4, scoped, tag = 'scoped memory for tpu_custom_call.1']
    #allocation5 [shape = 'u8[32768]{0}', space=vmem, size = 0x8000, scoped, tag = 'input window, operand 1, single buffered']
    #allocation6 [shape = 's32[1]{0}', space=sflag, size = 0x4, scoped, tag = 'scoped memory for tpu_custom_call.1']
    #allocation7 [shape = 'u8[4096]{0}', space=vmem, size = 0x1000, scoped, tag = 'output window, operand 0, single buffered']
    %8 = vsyncpa [#allocation3], 0
    %9 = vsyncpa [#allocation6], 0
    %10 = vsyncpa [#allocation4], 0
    // Predicated region
    $region2: #{tpu_custom_call.1} parent=1 // pred_check
      _
    $region3: #{tpu_custom_call.1} parent=1 // pred_check_branch
      %12 = sbr.rel (0) target = $region5
    $region4: #{tpu_custom_call.1} parent=1 // pred_region
      %s14 = ssub.s32 64, 64
      %15 = vsyncadd [#allocation3], %s14
      %s17 = sshll.u32 [#allocation2], 4
      %s18 = int_to_ptr.vmem [resolvable:$true] %s17
      %20 = dma.hbm_to_vmem [thread:$0]  %s0, 64, %s18, [#allocation3]
    $region5: #{tpu_custom_call.1} parent=1 // pred_fallthru
      _
    // Predicated region
    $region6: #{tpu_custom_call.1} parent=1 // pred_check
      _
    $region7: #{tpu_custom_call.1} parent=1 // pred_check_branch
      %22 = sbr.rel (0) target = $region9
    $region8: #{tpu_custom_call.1} parent=1 // pred_region
      %s24 = ssub.s32 1024, 1024
      %25 = vsyncadd [#allocation6], %s24
      %s26 = sshll.u32 [#allocation5], 4
      %s27 = int_to_ptr.vmem [resolvable:$true] %s26
      %32 = dma.hbm_to_vmem [thread:$0]  %s1, 1024, %s27, [#allocation6], 64, 64, 4
    $region9: #{tpu_custom_call.1} parent=1 // pred_fallthru
      _
    // Predicated region
    $region10: #{tpu_custom_call.1} parent=1 // pred_check
      _
    $region11: #{tpu_custom_call.1} parent=1 // pred_check_branch
      %34 = sbr.rel (0) target = $region13
    $region12: #{tpu_custom_call.1} parent=1 // pred_region
      _
    $region13: #{tpu_custom_call.1} parent=1 // pred_fallthru
      _
    // Predicated region
    $region14: #{tpu_custom_call.1} parent=1 // pred_check
      _
    $region15: #{tpu_custom_call.1} parent=1 // pred_check_branch
      %36 = sbr.rel (0) target = $region17
    $region16: #{tpu_custom_call.1} parent=1 // pred_region
      %37 = dma.done [#allocation3], 64
    $region17: #{tpu_custom_call.1} parent=1 // pred_fallthru
      _
    // Predicated region
    $region18: #{tpu_custom_call.1} parent=1 // pred_check
      _
    $region19: #{tpu_custom_call.1} parent=1 // pred_check_branch
      %39 = sbr.rel (0) target = $region21
    $region20: #{tpu_custom_call.1} parent=1 // pred_region
      %40 = dma.done [#allocation6], 1024
    $region21: #{tpu_custom_call.1} parent=1 // pred_fallthru
      _
    %v42 = vld [vmem:[#allocation2] sm:$0xf]
    %v43 = vld [vmem:[#allocation5] sm:$0xf]
    %v44 = vld [vmem:[#allocation5 + $0x4] sm:$0xf]
    %v45 = vld [vmem:[#allocation5 + $0x8] sm:$0xf]
    %v46 = vld [vmem:[#allocation5 + $0xc] sm:$0xf]
    %v47 = vld [vmem:[#allocation5 + $0x10] sm:$0xf]
    %v48 = vld [vmem:[#allocation5 + $0x14] sm:$0xf]
    %v49 = vld [vmem:[#allocation5 + $0x18] sm:$0xf]
    %v50 = vld [vmem:[#allocation5 + $0x1c] sm:$0xf]
    %v51 = vld [vmem:[#allocation5 + $0x20] sm:$0xf]
    %v52 = vld [vmem:[#allocation5 + $0x24] sm:$0xf]
    %v53 = vld [vmem:[#allocation5 + $0x28] sm:$0xf]
    %v54 = vld [vmem:[#allocation5 + $0x2c] sm:$0xf]
    %v55 = vld [vmem:[#allocation5 + $0x30] sm:$0xf]
    %v56 = vld [vmem:[#allocation5 + $0x34] sm:$0xf]
    %v57 = vld [vmem:[#allocation5 + $0x38] sm:$0xf]
    %v58 = vld [vmem:[#allocation5 + $0x3c] sm:$0xf]
    %v59 = vld [vmem:[%s2] sm:$0x1]
    %v61 = vlaneseq
    %v62 = vshrl.u32 %v61, 7
    %v63 = vsub.s32 0, %v62
    %v64 = vrot.slane %v59, %v63
    %v82 = vunpack.c.l.b16 %v43
    %v83 = vunpack.c.l.b16 %v44
    %v84 = vunpack.c.l.b16 %v45
    %v85 = vunpack.c.l.b16 %v46
    %v86 = vunpack.c.l.b16 %v47
    %v87 = vunpack.c.l.b16 %v48
    %v88 = vunpack.c.l.b16 %v49
    %v89 = vunpack.c.l.b16 %v50
    %v90 = vunpack.c.l.b16 %v51
    %v91 = vunpack.c.l.b16 %v52
    %v92 = vunpack.c.l.b16 %v53
    %v93 = vunpack.c.l.b16 %v54
    %v94 = vunpack.c.l.b16 %v55
    %v95 = vunpack.c.l.b16 %v56
    %v96 = vunpack.c.l.b16 %v57
    %v97 = vunpack.c.l.b16 %v58
    %v98 = vpack.c.b16 %v83, %v82
    %v99 = vpack.c.b16 %v85, %v84
    %v100 = vpack.c.b16 %v87, %v86
    %v101 = vpack.c.b16 %v89, %v88
    %v102 = vpack.c.b16 %v91, %v90
    %v103 = vpack.c.b16 %v93, %v92
    %v104 = vpack.c.b16 %v95, %v94
    %v105 = vpack.c.b16 %v97, %v96
    %114 = vmatprep.subr.bf16.mxu0 0
    %115 = vmatpush1.bf16.msra.mxu0 %v98
    %116 = vmatprep.subr.bf16.mxu0 0
    %117 = vmatpush1.bf16.msra.mxu0 %v99
    %118 = vmatprep.subr.bf16.mxu0 0
    %119 = vmatpush1.bf16.msra.mxu0 %v100
    %120 = vmatprep.subr.bf16.mxu0 0
    %121 = vmatpush1.bf16.msra.mxu0 %v101
    %122 = vmatprep.subr.bf16.mxu0 0
    %123 = vmatpush1.bf16.msra.mxu0 %v102
    %124 = vmatprep.subr.bf16.mxu0 0
    %125 = vmatpush1.bf16.msra.mxu0 %v103
    %126 = vmatprep.subr.bf16.mxu0 0
    %127 = vmatpush1.bf16.msra.mxu0 %v104
    %128 = vmatprep.subr.bf16.mxu0 0
    %129 = vmatpush1.bf16.msra.mxu0 %v105
    %130 = vmatprep.subr.bf16.mxu0 0
    %131 = vmatpush1.bf16.msra.mxu0 0
    %132 = vmatprep.subr.bf16.mxu0 0
    %133 = vmatpush1.bf16.msra.mxu0 0
    %134 = vmatprep.subr.bf16.mxu0 0
    %135 = vmatpush1.bf16.msra.mxu0 0
    %136 = vmatprep.subr.bf16.mxu0 0
    %137 = vmatpush1.bf16.msra.mxu0 0
    %138 = vmatprep.subr.bf16.mxu0 0
    %139 = vmatpush1.bf16.msra.mxu0 0
    %140 = vmatprep.subr.bf16.mxu0 0
    %141 = vmatpush1.bf16.msra.mxu0 0
    %142 = vmatprep.subr.bf16.mxu0 0
    %143 = vmatpush1.bf16.msra.mxu0 0
    %144 = vmatprep.subr.bf16.mxu0 0
    %145 = vmatpush1.bf16.msra.mxu0 0
    %146 = vmatprep.mubr.bf16.mxu0 0
    %147 = vmatmul.mubr.bf16.gmra.mrb[0].mxu0 %v42
    %v148 = vpop.f32.mrb[0].mxu0
    %v149 = vadd.f32 %v64, %v148
    %v150 = vpop.f32.mrb[0].mxu0
    %v151 = vpop.f32.mrb[0].mxu0
    %v152 = vpop.f32.mrb[0].mxu0
    %153 = vdwg.mxu0
    %154 = vmax.xlane.f32.xlu0 %v149
    %v155 = vpop.xlane.xlu0 %154
    %v156 = vsub.f32 %v149, %v155
    %v157 = vmul.f32 %v156, 1.442695
    %v158 = vpow.pop %v157
    %159 = vadd.xlane.f32.xlu0 %v158
    %v160 = vpop.xlane.xlu0 %159
    %v161 = vrcp.pop %v160
    %v162 = vmul.f32 %v158, %v161
    %163 = vst [vmem:[#allocation7] sm:$0xff] %v162
    // Predicated region
    $region22: #{tpu_custom_call.1} parent=1 // pred_check
      _
    $region23: #{tpu_custom_call.1} parent=1 // pred_check_branch
      %165 = sbr.rel (0) target = $region25
    $region24: #{tpu_custom_call.1} parent=1 // pred_region
      %s167 = ssub.s32 128, 128
      %168 = vsyncadd [#allocation4], %s167
      %s170 = sshll.u32 [#allocation7], 4
      %s171 = int_to_ptr.vmem [resolvable:$true] %s170
      %173 = dma.vmem_to_hbm [thread:$0]  %s171, 128, %s3, [#allocation4]
    $region25: #{tpu_custom_call.1} parent=1 // pred_fallthru
      _
    // Predicated region
    $region26: #{tpu_custom_call.1} parent=1 // pred_check
      _
    $region27: #{tpu_custom_call.1} parent=1 // pred_check_branch
      %175 = sbr.rel (0) target = $region29
    $region28: #{tpu_custom_call.1} parent=1 // pred_region
      %176 = dma.done [#allocation4], 128
    $region29: #{tpu_custom_call.1} parent=1 // pred_fallthru
      _
    %177 = vsyncpa [#allocation3], 1
    %178 = vsyncpa [#allocation6], 1
    %179 = vsyncpa [#allocation4], 1

</llo_original>
